<compile_context>
chip_gen: v6e
topology: v6e:2x2x1
jax: 0.10.0
libtpu: 0.0.40
codegen_flags: <defaults>
</compile_context>

<pallas_src>
import math
import time
import functools

import jax
import jax.numpy as jnp
from jax.experimental import pallas as pl
from jax.experimental.pallas import tpu as pltpu

LANES = 128
SUBLANES = 8
BLOCK_ROWS = 256           # 256 x 128 f32 = 128 KiB per stream buffer

# Abramowitz & Stegun 7.1.26 erfc approximation (|abs err| <= 1.5e-7 for x >= 0).
_ERFC_P = 0.3275911
_ERFC_A1 = 0.254829592
_ERFC_A2 = -0.284496736
_ERFC_A3 = 1.421413741
_ERFC_A4 = -1.453152027
_ERFC_A5 = 1.061405429
_TWO_OVER_SQRT_PI = 2.0 / math.sqrt(math.pi)


def _cdiv(a, b):
    return -(-a // b)


def _round_up(a, b):
    return _cdiv(a, b) * b


def _fused_recips(r, x):
    """inv_r = 1/r and t = 1/(1 + P*x) from ONE approximate reciprocal.

    d = r*(1 + P*x); w ~= 1/d (single EUP vrcp), refined with one Newton step
    (VALU, ~free); then 1/r = w*(1 + P*x) and 1/(1 + P*x) = w*r.
    """
    u = 1.0 + _ERFC_P * x
    d = r * u
    w = pl.reciprocal(d, approx=True)      # the only reciprocal (EUP slot)
    w = w * (2.0 - d * w)                  # Newton refinement on VALU slack
    inv_r = w * u
    t = w * r
    return inv_r, t


def _erfc_poly(t, ex):
    """erfc(x) for x >= 0 from t = 1/(1+P*x) and ex = exp(-x*x) (no 1-erf cancellation)."""
    poly = t * (_ERFC_A1 + t * (_ERFC_A2 + t * (_ERFC_A3 + t * (_ERFC_A4 + t * _ERFC_A5))))
    return poly * ex


# ----------------------------------------------------------------------------
# Pallas kernels: per-pair short-range Coulomb potential (and its gradient)
#   V_sr(r) = erfc(r / (sqrt(2) * smearing)) / r
#   oi = q_j * V_sr(r)   (contribution to potential[i])
#   oj = q_i * V_sr(r)   (contribution to potential[j])
# ----------------------------------------------------------------------------
def _pair_fwd_kernel(qi_ref, qj_ref, r_ref, oi_ref, oj_ref, *, a):
    r = r_ref[...]
    x = a * r
    inv_r, t = _fused_recips(r, x)
    ex = jnp.exp(-(x * x))                 # EUP
    v = _erfc_poly(t, ex) * inv_r
    oi_ref[...] = qj_ref[...] * v
    oj_ref[...] = qi_ref[...] * v


def _pair_bwd_kernel(qi_ref, qj_ref, r_ref, goi_ref, goj_ref,
                     dqi_ref, dqj_ref, dr_ref, *, a):
    # TODO(synk): on v7x (EUP-bound bwd) stashing exp(-x^2) as a forward
    # residual would save one exp here; skipped to stay optimal on
    # bandwidth-bound v5e (recompute is cheaper than the extra HBM stream).
    r = r_ref[...]
    qi = qi_ref[...]
    qj = qj_ref[...]
    goi = goi_ref[...]
    goj = goj_ref[...]
    x = a * r
    inv_r, t = _fused_recips(r, x)
    ex = jnp.exp(-(x * x))                 # shared between erfc and dV/dr
    erfc = _erfc_poly(t, ex)
    v = erfc * inv_r
    # dV/dr = -erfc(ar)/r^2 - (2a/sqrt(pi)) * exp(-(ar)^2) / r
    dv = -inv_r * (erfc * inv_r + (_TWO_OVER_SQRT_PI * a) * ex)
    dqj_ref[...] = goi * v
    dqi_ref[...] = goj * v
    dr_ref[...] = (goi * qj + goj * qi) * dv


# ----------------------------------------------------------------------------
# Grid / BlockSpec construction
# ----------------------------------------------------------------------------
def _choose_block_rows(rows):
    if rows <= BLOCK_ROWS:
        return rows                        # one block == full array dims (always legal)
    if rows % BLOCK_ROWS == 0:
        return BLOCK_ROWS
    # Robust fallback for direct callers with awkward row counts: largest
    # multiple-of-SUBLANES divisor of rows not exceeding BLOCK_ROWS.
    for cand in range(BLOCK_ROWS, SUBLANES - 1, -SUBLANES):
        if rows % cand == 0:
            return cand
    return rows                            # no divisor: single full-array block


def _specs(rows):
    block_rows = _choose_block_rows(rows)
    grid = (rows // block_rows,)
    idx = lambda i: (i, 0)
    out_spec = pl.BlockSpec((block_rows, LANES), idx)
    in_spec = out_spec
    # Deeper input buffering only where it can help (long pipelines); guarded so
    # the script still runs on jax versions without pipeline_mode/Buffered.
    if grid[0] >= 3 and hasattr(pl, "Buffered"):
        try:
            in_spec = pl.BlockSpec((block_rows, LANES), idx,
                                   pipeline_mode=pl.Buffered(3))
        except TypeError:
            in_spec = out_spec
    return grid, in_spec, out_spec


def _compiler_params():
    return pltpu.CompilerParams(
        dimension_semantics=("parallel",),     # multi-block grids shard over TCs on v7x
        vmem_limit_bytes=32 * 1024 * 1024)


def _pair_fwd_call(qi, qj, r, smearing):
    rows = qi.shape[0]
    grid, in_spec, out_spec = _specs(rows)
    kern = functools.partial(_pair_fwd_kernel, a=1.0 / (math.sqrt(2.0) * smearing))
    return pl.pallas_call(
        kern,
        out_shape=(jax.ShapeDtypeStruct((rows, LANES), jnp.float32),
                   jax.ShapeDtypeStruct((rows, LANES), jnp.float32)),
        grid_spec=pltpu.PrefetchScalarGridSpec(
            num_scalar_prefetch=0,
            grid=grid,
            in_specs=[in_spec, in_spec, in_spec],
            out_specs=[out_spec, out_spec]),
        compiler_params=_compiler_params(),
    )(qi, qj, r)


def _pair_bwd_call(qi, qj, r, goi, goj, smearing):
    rows = qi.shape[0]
    grid, in_spec, out_spec = _specs(rows)
    kern = functools.partial(_pair_bwd_kernel, a=1.0 / (math.sqrt(2.0) * smearing))
    return pl.pallas_call(
        kern,
        out_shape=(jax.ShapeDtypeStruct((rows, LANES), jnp.float32),) * 3,
        grid_spec=pltpu.PrefetchScalarGridSpec(
            num_scalar_prefetch=0,
            grid=grid,
            in_specs=[in_spec] * 5,
            out_specs=[out_spec] * 3),
        compiler_params=_compiler_params(),
    )(qi, qj, r, goi, goj)


@functools.partial(jax.custom_vjp, nondiff_argnums=(3,))
def pair_potentials(qi, qj, r, smearing):
    return _pair_fwd_call(qi, qj, r, smearing)


def _pair_vjp_fwd(qi, qj, r, smearing):
    out = _pair_fwd_call(qi, qj, r, smearing)
    return out, (qi, qj, r)


def _pair_vjp_bwd(smearing, residuals, cotangents):
    qi, qj, r = residuals
    goi, goj = cotangents
    dqi, dqj, dr = _pair_bwd_call(qi, qj, r, goi, goj, smearing)
    return dqi, dqj, dr


pair_potentials.defvjp(_pair_vjp_fwd, _pair_vjp_bwd)


# ----------------------------------------------------------------------------
# A minimal "calculator" with the torchpme forward signature; the per-pair
# potential evaluation (the hot path) runs in the Pallas kernel, the
# gather/scatter glue stays in plain JAX with minimal extra HBM passes.
# ----------------------------------------------------------------------------
class EwaldRealSpaceCalculator:
    def __init__(self, smearing: float = 1.0):
        self.smearing = float(smearing)

    def forward(self, positions, charges, cell, neighbor_indices, neighbor_distances):
        n_atoms = positions.shape[0]
        n_pairs = neighbor_indices.shape[0]

        # Padded pair count: full lanes, rows rounded to SUBLANES (small) or
        # BLOCK_ROWS (multi-block) -- padding no longer tied to one huge block.
        raw_rows = _cdiv(max(n_pairs, 1), LANES)
        if raw_rows <= BLOCK_ROWS:
            rows = _round_up(raw_rows, SUBLANES)
        else:
            rows = _round_up(raw_rows, BLOCK_ROWS)
        n_padded = rows * LANES
        pad = n_padded - n_pairs

        i_idx = neighbor_indices[:, 0].astype(jnp.int32)
        j_idx = neighbor_indices[:, 1].astype(jnp.int32)
        r = neighbor_distances.astype(jnp.float32)
        if pad:
            # Pad the *index* arrays with a dummy atom slot (index n_atoms,
            # charge 0): the gather then writes padded (zero) charges directly
            # and the scatter-adds dump the zero padded contributions into a
            # slot that is dropped -- no concatenate copies of qi/qj/ci/cj.
            fill = jnp.full((pad,), n_atoms, jnp.int32)
            i_idx = jnp.concatenate([i_idx, fill])
            j_idx = jnp.concatenate([j_idx, fill])
            r = jnp.concatenate([r, jnp.ones((pad,), jnp.float32)])  # safe r (no div-by-0)

        # TODO(synk): charge gather is still done in XLA (a general dynamic
        # gather is not expressible as a BlockSpec and in-kernel jnp.take over
        # an arbitrary-length table is not guaranteed to lower on all chips).
        charges_ext = jnp.concatenate(
            [charges[:, 0].astype(jnp.float32), jnp.zeros((1,), jnp.float32)])
        qi = charges_ext[i_idx].reshape(rows, LANES)
        qj = charges_ext[j_idx].reshape(rows, LANES)
        r2 = r.reshape(rows, LANES)

        ci, cj = pair_potentials(qi, qj, r2, self.smearing)

        # Two scatter-adds into an (n_atoms+1)-slot buffer; padded entries hit
        # the dummy slot with zero values and the slot is dropped below.
        # TODO(synk): per-atom accumulation stays in XLA (a duplicate-index
        # scatter inside the kernel has no clean Pallas TPU equivalent).
        pot = jnp.zeros((n_atoms + 1,), jnp.float32)
        pot = pot.at[i_idx].add(ci.reshape(-1))
        pot = pot.at[j_idx].add(cj.reshape(-1))
        # TODO(synk): reciprocal-space (k-space) and self-interaction terms of the
        # full Ewald calculator are not reproduced here; only the real-space path.
        return 0.5 * pot[:n_atoms, None]


def _reference_forward(positions, charges, cell, neighbor_indices,
                       neighbor_distances, smearing):
    """Pure-JAX reference for the real-space path (correctness check only)."""
    i_idx = neighbor_indices[:, 0]
    j_idx = neighbor_indices[:, 1]
    qi = charges[i_idx, 0].astype(jnp.float32)
    qj = charges[j_idx, 0].astype(jnp.float32)
    r = neighbor_distances.astype(jnp.float32)
    v = jax.scipy.special.erfc(r / (math.sqrt(2.0) * smearing)) / r
    n_atoms = positions.shape[0]
    pot = jnp.zeros((n_atoms,), jnp.float32)
    pot = pot.at[i_idx].add(qj * v)
    pot = pot.at[j_idx].add(qi * v)
    return 0.5 * pot[:, None]


# ----------------------------------------------------------------------------
# TuningTimings: same semantics as the PyTorch module's forward — run the
# calculator n_warmup + n_repeat times, time the post-warmup runs, and return
# the average wall-clock time per run.
# ----------------------------------------------------------------------------
def _validate_parameters(charges, cell, positions, neighbor_indices,
                         neighbor_distances, smearing):
    assert positions.ndim == 2 and positions.shape[1] == 3
    assert cell.shape == (3, 3)
    assert charges.shape == (positions.shape[0], 1)
    assert neighbor_indices.ndim == 2 and neighbor_indices.shape[1] == 2
    assert neighbor_distances.shape == (neighbor_indices.shape[0],)
    assert smearing > 0.0


class TuningTimings:
    def __init__(self, charges, cell, positions, neighbor_indices,
                 neighbor_distances, n_repeat: int = 4, n_warmup: int = 4,
                 run_backward: bool = True):
        _validate_parameters(charges=charges, cell=cell, positions=positions,
                             neighbor_indices=neighbor_indices,
                             neighbor_distances=neighbor_distances, smearing=1.0)
        self.charges = charges
        self.cell = cell
        self.positions = positions
        self.n_repeat = n_repeat
        self.n_warmup = n_warmup
        self.run_backward = run_backward
        self.neighbor_indices = neighbor_indices
        self.neighbor_distances = neighbor_distances

    def forward(self, calculator):
        ni = self.neighbor_indices
        nd = self.neighbor_distances

        def loss(positions, charges, cell):
            result = calculator.forward(positions=positions, charges=charges,
                                        cell=cell, neighbor_indices=ni,
                                        neighbor_distances=nd)
            return result.sum()

        if self.run_backward:
            # TODO(synk): grads w.r.t. positions/cell are zero here because the
            # calculator consumes precomputed neighbor_distances, mirroring the
            # structure (not the full cost) of torchpme's backward.
            step = jax.jit(jax.value_and_grad(loss, argnums=(0, 1, 2)))
        else:
            step = jax.jit(loss)

        execution_time = 0.0
        for it in range(self.n_repeat + self.n_warmup):
            if it == self.n_warmup:
                execution_time = 0.0
            positions = self.positions
            cell = self.cell
            charges = self.charges
            execution_time -= time.monotonic()
            out = step(positions, charges, cell)
            jax.block_until_ready(out)
            execution_time += time.monotonic()
        return execution_time / self.n_repeat


# ----------------------------------------------------------------------------
if __name__ == "__main__":
    key = jax.random.PRNGKey(0)
    k1, k2, k3, k4, k5, k6, k7, k8 = jax.random.split(key, 8)

    n_atoms = 32
    n_pairs = 300  # not a multiple of the lane/row granularity -> exercises padding

    positions = jax.random.uniform(k1, (n_atoms, 3), jnp.float32) * 4.0
    cell = jnp.eye(3, dtype=jnp.float32) * 4.0
    charges = jax.random.normal(k2, (n_atoms, 1), jnp.float32)
    neighbor_indices = jax.random.randint(k3, (n_pairs, 2), 0, n_atoms)
    neighbor_distances = jax.random.uniform(k4, (n_pairs,), jnp.float32,
                                            minval=0.5, maxval=3.5)

    calculator = EwaldRealSpaceCalculator(smearing=1.0)

    # One direct calculator call to exercise the Pallas forward kernel (grid=1).
    potentials = calculator.forward(positions=positions, charges=charges,
                                    cell=cell,
                                    neighbor_indices=neighbor_indices,
                                    neighbor_distances=neighbor_distances)
    jax.block_until_ready(potentials)
    assert potentials.shape == (n_atoms, 1)
    assert bool(jnp.all(jnp.isfinite(potentials)))

    ref = _reference_forward(positions, charges, cell, neighbor_indices,
                             neighbor_distances, smearing=1.0)
    assert bool(jnp.allclose(potentials, ref, rtol=1e-3, atol=1e-3))

    # Medium problem: exercises the multi-block grid (>= 2 blocks of 256 rows,
    # megacore-shardable) and the deeper input buffering path.
    n_atoms_big = 128
    n_pairs_big = 70_000
    positions_big = jax.random.uniform(k5, (n_atoms_big, 3), jnp.float32) * 8.0
    charges_big = jax.random.normal(k6, (n_atoms_big, 1), jnp.float32)
    neighbor_indices_big = jax.random.randint(k7, (n_pairs_big, 2), 0, n_atoms_big)
    neighbor_distances_big = jax.random.uniform(k8, (n_pairs_big,), jnp.float32,
                                                minval=0.5, maxval=3.5)
    pot_big = calculator.forward(positions=positions_big, charges=charges_big,
                                 cell=cell,
                                 neighbor_indices=neighbor_indices_big,
                                 neighbor_distances=neighbor_distances_big)
    jax.block_until_ready(pot_big)
    ref_big = _reference_forward(positions_big, charges_big, cell,
                                 neighbor_indices_big, neighbor_distances_big,
                                 smearing=1.0)
    assert bool(jnp.allclose(pot_big, ref_big, rtol=2e-3, atol=2e-3))

    # Timing harness (also exercises the backward Pallas kernel via custom_vjp).
    timer = TuningTimings(charges=charges, cell=cell, positions=positions,
                          neighbor_indices=neighbor_indices,
                          neighbor_distances=neighbor_distances,
                          n_repeat=2, n_warmup=2, run_backward=True)
    avg_time = timer.forward(calculator)
    assert math.isfinite(avg_time) and avg_time >= 0.0

    print("KERNEL_OK")
</pallas_src>

<mosaic_0001>
module attributes {stable_mosaic.version = 11 : i64} {
  func.func @_pair_fwd_kernel(%arg0: i32, %arg1: memref<8x128xf32, #tpu.memory_space<vmem>>, %arg2: memref<8x128xf32, #tpu.memory_space<vmem>>, %arg3: memref<8x128xf32, #tpu.memory_space<vmem>>, %arg4: memref<8x128xf32, #tpu.memory_space<vmem>>, %arg5: memref<8x128xf32, #tpu.memory_space<vmem>>) attributes {dimension_semantics = [#tpu.dimension_semantics<parallel>], iteration_bounds = array<i64: 1>, scalar_prefetch = 0 : i64, scratch_operands = 0 : i64, tpu.core_type = #tpu.core_type<tc>, window_params = [{transform_indices = @transform_0, window_bounds = array<i64: 8, 128>}, {transform_indices = @transform_1, window_bounds = array<i64: 8, 128>}, {transform_indices = @transform_2, window_bounds = array<i64: 8, 128>}, {transform_indices = @transform_3, window_bounds = array<i64: 8, 128>}, {transform_indices = @transform_4, window_bounds = array<i64: 8, 128>}]} {
    %c0 = arith.constant 0 : index
    %c0_0 = arith.constant 0 : index
    %0 = vector.load %arg3[%c0, %c0_0] : memref<8x128xf32, #tpu.memory_space<vmem>>, vector<8x128xf32>
    %cst = arith.constant 0.707106769 : f32
    %1 = vector.broadcast %cst : f32 to vector<8x128xf32>
    %2 = arith.mulf %1, %0 : vector<8x128xf32>
    %cst_1 = arith.constant 0.327591091 : f32
    %3 = vector.broadcast %cst_1 : f32 to vector<8x128xf32>
    %4 = arith.mulf %3, %2 : vector<8x128xf32>
    %cst_2 = arith.constant 1.000000e+00 : f32
    %5 = vector.broadcast %cst_2 : f32 to vector<8x128xf32>
    %6 = arith.addf %5, %4 : vector<8x128xf32>
    %7 = arith.mulf %0, %6 : vector<8x128xf32>
    %8 = tpu.reciprocal %7 {approx = true} : vector<8x128xf32> -> vector<8x128xf32>
    %9 = arith.mulf %7, %8 : vector<8x128xf32>
    %cst_3 = arith.constant 2.000000e+00 : f32
    %10 = vector.broadcast %cst_3 : f32 to vector<8x128xf32>
    %11 = arith.subf %10, %9 : vector<8x128xf32>
    %12 = arith.mulf %8, %11 : vector<8x128xf32>
    %13 = arith.mulf %12, %6 : vector<8x128xf32>
    %14 = arith.mulf %12, %0 : vector<8x128xf32>
    %15 = arith.mulf %2, %2 : vector<8x128xf32>
    %cst_4 = arith.constant 0.000000e+00 : f32
    %16 = vector.broadcast %cst_4 : f32 to vector<8x128xf32>
    %17 = arith.subf %16, %15 : vector<8x128xf32>
    %18 = math.exp %17 : vector<8x128xf32>
    %cst_5 = arith.constant 1.06140542 : f32
    %19 = vector.broadcast %cst_5 : f32 to vector<8x128xf32>
    %20 = arith.mulf %14, %19 : vector<8x128xf32>
    %cst_6 = arith.constant -1.45315206 : f32
    %21 = vector.broadcast %cst_6 : f32 to vector<8x128xf32>
    %22 = arith.addf %21, %20 : vector<8x128xf32>
    %23 = arith.mulf %14, %22 : vector<8x128xf32>
    %cst_7 = arith.constant 1.42141378 : f32
    %24 = vector.broadcast %cst_7 : f32 to vector<8x128xf32>
    %25 = arith.addf %24, %23 : vector<8x128xf32>
    %26 = arith.mulf %14, %25 : vector<8x128xf32>
    %cst_8 = arith.constant -0.284496725 : f32
    %27 = vector.broadcast %cst_8 : f32 to vector<8x128xf32>
    %28 = arith.addf %27, %26 : vector<8x128xf32>
    %29 = arith.mulf %14, %28 : vector<8x128xf32>
    %cst_9 = arith.constant 0.254829586 : f32
    %30 = vector.broadcast %cst_9 : f32 to vector<8x128xf32>
    %31 = arith.addf %30, %29 : vector<8x128xf32>
    %32 = arith.mulf %14, %31 : vector<8x128xf32>
    %33 = arith.mulf %32, %18 : vector<8x128xf32>
    %34 = arith.mulf %33, %13 : vector<8x128xf32>
    %c0_10 = arith.constant 0 : index
    %c0_11 = arith.constant 0 : index
    %35 = vector.load %arg2[%c0_10, %c0_11] : memref<8x128xf32, #tpu.memory_space<vmem>>, vector<8x128xf32>
    %36 = arith.mulf %35, %34 : vector<8x128xf32>
    %c0_12 = arith.constant 0 : index
    %c0_13 = arith.constant 0 : index
    %37 = vector.load %arg4[%c0_12, %c0_13] : memref<8x128xf32, #tpu.memory_space<vmem>>, vector<8x128xf32>
    tpu.vector_store %arg4[%c0_12, %c0_13], %36 {strides = array<i32>} : memref<8x128xf32, #tpu.memory_space<vmem>>, vector<8x128xf32>,
    %c0_14 = arith.constant 0 : index
    %c0_15 = arith.constant 0 : index
    %38 = vector.load %arg1[%c0_14, %c0_15] : memref<8x128xf32, #tpu.memory_space<vmem>>, vector<8x128xf32>
    %39 = arith.mulf %38, %34 : vector<8x128xf32>
    %c0_16 = arith.constant 0 : index
    %c0_17 = arith.constant 0 : index
    %40 = vector.load %arg5[%c0_16, %c0_17] : memref<8x128xf32, #tpu.memory_space<vmem>>, vector<8x128xf32>
    tpu.vector_store %arg5[%c0_16, %c0_17], %39 {strides = array<i32>} : memref<8x128xf32, #tpu.memory_space<vmem>>, vector<8x128xf32>,
    return
  }
  func.func @transform_0(%arg0: i32) -> (i32, i32) {
    %c0_i32 = arith.constant 0 : i32
    %c0_i32_0 = arith.constant 0 : i32
    return %arg0, %c0_i32 : i32, i32
  }
  func.func @transform_1(%arg0: i32) -> (i32, i32) {
    %c0_i32 = arith.constant 0 : i32
    %c0_i32_0 = arith.constant 0 : i32
    return %arg0, %c0_i32 : i32, i32
  }
  func.func @transform_2(%arg0: i32) -> (i32, i32) {
    %c0_i32 = arith.constant 0 : i32
    %c0_i32_0 = arith.constant 0 : i32
    return %arg0, %c0_i32 : i32, i32
  }
  func.func @transform_3(%arg0: i32) -> (i32, i32) {
    %c0_i32 = arith.constant 0 : i32
    %c0_i32_0 = arith.constant 0 : i32
    return %arg0, %c0_i32 : i32, i32
  }
  func.func @transform_4(%arg0: i32) -> (i32, i32) {
    %c0_i32 = arith.constant 0 : i32
    %c0_i32_0 = arith.constant 0 : i32
    return %arg0, %c0_i32 : i32, i32
  }
}

</mosaic_0001>

<llo_original>
// kernel: tpu_custom_call.1
$region0: #{tpu_custom_call.1}
  #allocation0 [shape = 'u32[]', space=smem, size = 0x4, offset = 0x4, fixed_abs, tag = 'smem constant byte address 0x4 - core index']
  #allocation1 [shape = 'u32[144,128]{1,0:T(1,128)}', space=vmem, size = 0x12000, scoped, tag = 'internal scratch']
  %s0 = inlined_call_operand.hbm [shape: f32[8,128], index: 0, kind: input, shape index: {}]
  %s1 = inlined_call_operand.hbm [shape: f32[8,128], index: 1, kind: input, shape index: {}]
  %s2 = inlined_call_operand.hbm [shape: f32[8,128], index: 2, kind: input, shape index: {}]
  %s3 = inlined_call_operand.hbm [shape: f32[8,128], index: 3, kind: output, shape index: {0}]
  %s4 = inlined_call_operand.hbm [shape: f32[8,128], index: 4, kind: output, shape index: {1}]
  %5 = xla_tuple %s3, %s4
  %s6 = sld [smem:[#allocation0]]
  $region42: #{tpu_custom_call.1} parent=0
    _
  %s8 = ssub.s32 1, %s6
  %s9 = scalar_select 0, %s8, %s6
  $region1: #{tpu_custom_call.1} parent=0
    #allocation2 [shape = 'u8[4096]{0}', space=vmem, size = 0x1000, scoped, tag = 'input window, operand 0, single buffered']
    #allocation3 [shape = 's32[1]{0}', space=sflag, size = 0x4, scoped, tag = 'scoped memory for tpu_custom_call.1']
    #allocation4 [shape = 's32[1]{0}', space=sflag, size = 0x4, scoped, tag = 'scoped memory for tpu_custom_call.1']
    #allocation5 [shape = 'u8[4096]{0}', space=vmem, size = 0x1000, scoped, tag = 'input window, operand 1, single buffered']
    #allocation6 [shape = 's32[1]{0}', space=sflag, size = 0x4, scoped, tag = 'scoped memory for tpu_custom_call.1']
    #allocation7 [shape = 'u8[4096]{0}', space=vmem, size = 0x1000, scoped, tag = 'input window, operand 2, single buffered']
    #allocation8 [shape = 'u8[4096]{0}', space=vmem, size = 0x1000, scoped, tag = 'output window, operand 0, single buffered']
    #allocation9 [shape = 'u8[4096]{0}', space=vmem, size = 0x1000, scoped, tag = 'output window, operand 1, single buffered']
    #allocation10 [shape = 's32[1]{0}', space=sflag, size = 0x4, scoped, tag = 'scoped memory for tpu_custom_call.1']
    %10 = vsyncpa [#allocation3], 0
    %11 = vsyncpa [#allocation6], 0
    %12 = vsyncpa [#allocation4], 0
    %13 = vsyncpa [#allocation10], 0
    // Predicated region
    $region2: #{tpu_custom_call.1} parent=1 // pred_check
      _
    $region3: #{tpu_custom_call.1} parent=1 // pred_check_branch
      %15 = sbr.rel (0) target = $region5
    $region4: #{tpu_custom_call.1} parent=1 // pred_region
      %s17 = ssub.s32 128, 128
      %18 = vsyncadd [#allocation3], %s17
      %s20 = sshll.u32 [#allocation2], 4
      %s21 = int_to_ptr.vmem [resolvable:$true] %s20
      %23 = dma.hbm_to_vmem [thread:$0]  %s0, 128, %s21, [#allocation3]
    $region5: #{tpu_custom_call.1} parent=1 // pred_fallthru
      _
    // Predicated region
    $region6: #{tpu_custom_call.1} parent=1 // pred_check
      _
    $region7: #{tpu_custom_call.1} parent=1 // pred_check_branch
      %25 = sbr.rel (0) target = $region9
    $region8: #{tpu_custom_call.1} parent=1 // pred_region
      %s27 = ssub.s32 128, 128
      %28 = vsyncadd [#allocation6], %s27
      %s30 = sshll.u32 [#allocation5], 4
      %s31 = int_to_ptr.vmem [resolvable:$true] %s30
      %33 = dma.hbm_to_vmem [thread:$0]  %s1, 128, %s31, [#allocation6]
    $region9: #{tpu_custom_call.1} parent=1 // pred_fallthru
      _
    // Predicated region
    $region10: #{tpu_custom_call.1} parent=1 // pred_check
      _
    $region11: #{tpu_custom_call.1} parent=1 // pred_check_branch
      %35 = sbr.rel (0) target = $region13
    $region12: #{tpu_custom_call.1} parent=1 // pred_region
      %s37 = ssub.s32 128, 128
      %38 = vsyncadd [#allocation6], %s37
      %s40 = sshll.u32 [#allocation7], 4
      %s41 = int_to_ptr.vmem [resolvable:$true] %s40
      %43 = dma.hbm_to_vmem [thread:$0]  %s2, 128, %s41, [#allocation6]
    $region13: #{tpu_custom_call.1} parent=1 // pred_fallthru
      _
    // Predicated region
    $region14: #{tpu_custom_call.1} parent=1 // pred_check
      _
    $region15: #{tpu_custom_call.1} parent=1 // pred_check_branch
      %45 = sbr.rel (0) target = $region17
    $region16: #{tpu_custom_call.1} parent=1 // pred_region
      %46 = dma.done [#allocation3], 128
    $region17: #{tpu_custom_call.1} parent=1 // pred_fallthru
      _
    // Predicated region
    $region18: #{tpu_custom_call.1} parent=1 // pred_check
      _
    $region19: #{tpu_custom_call.1} parent=1 // pred_check_branch
      %48 = sbr.rel (0) target = $region21
    $region20: #{tpu_custom_call.1} parent=1 // pred_region
      %49 = dma.done [#allocation6], 128
    $region21: #{tpu_custom_call.1} parent=1 // pred_fallthru
      _
    // Predicated region
    $region22: #{tpu_custom_call.1} parent=1 // pred_check
      _
    $region23: #{tpu_custom_call.1} parent=1 // pred_check_branch
      %51 = sbr.rel (0) target = $region25
    $region24: #{tpu_custom_call.1} parent=1 // pred_region
      %52 = dma.done [#allocation6], 128
    $region25: #{tpu_custom_call.1} parent=1 // pred_fallthru
      _
    %v53 = vld [vmem:[#allocation7] sm:$0xff]
    %v54 = vmul.f32 %v53, 0.70710677
    %v55 = vmul.f32 %v54, 0.3275911
    %v56 = vadd.f32 %v55, 1.0
    %v57 = vmul.f32 %v53, %v56
    %v58 = vrcp.pop %v57
    %v59 = vmul.f32 %v57, %v58
    %v60 = vsub.f32 2.0, %v59
    %v61 = vmul.f32 %v58, %v60
    %v62 = vmul.f32 %v61, %v56
    %v63 = vmul.f32 %v61, %v53
    %v64 = vmul.f32 %v54, %v54
    %v65 = vsub.f32 0.0, %v64
    %v66 = vmul.f32 %v65, 1.442695
    %v67 = vpow.pop %v66
    %v68 = vmul.f32 %v63, 1.0614054
    %v69 = vadd.f32 %v68, -1.4531521
    %v70 = vmul.f32 %v63, %v69
    %v71 = vadd.f32 %v70, 1.4214138
    %v72 = vmul.f32 %v63, %v71
    %v73 = vadd.f32 %v72, -0.28449672
    %v74 = vmul.f32 %v63, %v73
    %v75 = vadd.f32 %v74, 0.2548296
    %v76 = vmul.f32 %v63, %v75
    %v77 = vmul.f32 %v76, %v67
    %v78 = vmul.f32 %v77, %v62
    %v79 = vld [vmem:[#allocation5] sm:$0xff]
    %v80 = vmul.f32 %v79, %v78
    %81 = vst [vmem:[#allocation8] sm:$0xff] %v80
    %v82 = vld [vmem:[#allocation2] sm:$0xff]
    %v83 = vmul.f32 %v82, %v78
    %84 = vst [vmem:[#allocation9] sm:$0xff] %v83
    // Predicated region
    $region26: #{tpu_custom_call.1} parent=1 // pred_check
      _
    $region27: #{tpu_custom_call.1} parent=1 // pred_check_branch
      %86 = sbr.rel (0) target = $region29
    $region28: #{tpu_custom_call.1} parent=1 // pred_region
      %s88 = ssub.s32 128, 128
      %89 = vsyncadd [#allocation4], %s88
      %s91 = sshll.u32 [#allocation8], 4
      %s92 = int_to_ptr.vmem [resolvable:$true] %s91
      %94 = dma.vmem_to_hbm [thread:$0]  %s92, 128, %s3, [#allocation4]
    $region29: #{tpu_custom_call.1} parent=1 // pred_fallthru
      _
    // Predicated region
    $region30: #{tpu_custom_call.1} parent=1 // pred_check
      _
    $region31: #{tpu_custom_call.1} parent=1 // pred_check_branch
      %96 = sbr.rel (0) target = $region33
    $region32: #{tpu_custom_call.1} parent=1 // pred_region
      %s98 = ssub.s32 128, 128
      %99 = vsyncadd [#allocation10], %s98
      %s101 = sshll.u32 [#allocation9], 4
      %s102 = int_to_ptr.vmem [resolvable:$true] %s101
      %104 = dma.vmem_to_hbm [thread:$0]  %s102, 128, %s4, [#allocation10]
    $region33: #{tpu_custom_call.1} parent=1 // pred_fallthru
      _
    // Predicated region
    $region34: #{tpu_custom_call.1} parent=1 // pred_check
      _
    $region35: #{tpu_custom_call.1} parent=1 // pred_check_branch
      %106 = sbr.rel (0) target = $region37
    $region36: #{tpu_custom_call.1} parent=1 // pred_region
      %107 = dma.done [#allocation4], 128
    $region37: #{tpu_custom_call.1} parent=1 // pred_fallthru
      _
    // Predicated region
    $region38: #{tpu_custom_call.1} parent=1 // pred_check
      _
    $region39: #{tpu_custom_call.1} parent=1 // pred_check_branch
      %109 = sbr.rel (0) target = $region41
    $region40: #{tpu_custom_call.1} parent=1 // pred_region
      %110 = dma.done [#allocation10], 128
    $region41: #{tpu_custom_call.1} parent=1 // pred_fallthru
      _
    %111 = vsyncpa [#allocation3], 1
    %112 = vsyncpa [#allocation6], 1
    %113 = vsyncpa [#allocation4], 1
    %114 = vsyncpa [#allocation10], 1

</llo_original>
